<compile_context>
chip_gen: v5e
topology: v5e:2x2
jax: 0.10.0
libtpu: 0.0.40
codegen_flags: <defaults>
</compile_context>

<pallas_src>
import jax
import jax.numpy as jnp
from jax.experimental import pallas as pl
from jax.experimental.pallas import tpu as pltpu


def _pad_up(n, m):
    return ((n + m - 1) // m) * m


def _sublane(dtype):
    # Sublane packing of the second-to-last dim: 8 for 32-bit, 16 for 16-bit,
    # 32 for 8-bit dtypes.
    return {4: 8, 2: 16, 1: 32}.get(jnp.dtype(dtype).itemsize, 8)


def _vmem_plan():
    """Generation-aware scoped-VMEM limit, per-step tile budget, and whether we
    should prefer >=2 (even) grid steps for megacore sharding (v7x)."""
    try:
        cap = int(pltpu.get_tpu_info().vmem_capacity_bytes)
    except Exception:
        cap = 64 << 20  # conservative fallback (v7x per-TC size; safe everywhere)
    if cap >= (96 << 20):
        # v5e / v6e: 128 MiB physical VMEM.  Raise the scoped limit well past
        # the 16/32 MiB defaults so TD (and thus DMA size) can grow.
        vmem_limit = 100 << 20
        want_two_steps = False
    else:
        # v7x: 64 MiB physical, 2 TensorCores per chip.
        vmem_limit = 48 << 20
        want_two_steps = True
    # Resident set ~= 2x per-step tiles (double buffering) + compiler scratch;
    # keep ~20% headroom under the scoped limit.
    tile_budget = int(vmem_limit * 0.8) // 2
    return vmem_limit, tile_budget, want_two_steps


def _pick_td(D, B, I, O, x_dtype, w_dtype, b_dtype, out_dtype,
             tile_budget, want_two_steps):
    """Largest legal D-block TD whose *padded* per-step tiles fit the budget."""
    x_it = jnp.dtype(x_dtype).itemsize
    w_it = jnp.dtype(w_dtype).itemsize
    b_it = jnp.dtype(b_dtype).itemsize
    o_it = jnp.dtype(out_dtype).itemsize

    # Padded VMEM bytes per unit of TD (last dim -> 128 lanes, second-to-last
    # of the weight tile -> its dtype sublane; the TD axis itself is kept
    # sublane-aligned by the divisor selection below).
    per_d = (
        B * _pad_up(I, 128) * x_it                                  # x tile slice
        + _pad_up(I, _sublane(w_dtype)) * _pad_up(O, 128) * w_it    # weight slice
        + _pad_up(O, 128) * b_it                                    # bias slice
        + B * _pad_up(O, 128) * o_it                                # out slice
    )
    max_td = max(1, tile_budget // max(per_d, 1))
    if want_two_steps:
        max_td = min(max_td, max(1, D // 2))

    divisors = sorted({d for i in range(1, int(D ** 0.5) + 1) if D % i == 0
                       for d in (i, D // i)})
    # Hard constraint from the (8, 128) block-shape rule on the second-to-last
    # dim of the x/out/bias blocks: TD must be a multiple of 8 or equal D.
    legal = [t for t in divisors if (t % 8 == 0) or (t == D)]
    fitting = [t for t in legal if t <= max_td]
    if not fitting:
        # Nothing legal fits the heuristic budget: take the smallest legal tile
        # (correctness over the VMEM heuristic; vmem_limit still has headroom).
        # TODO(synk): pad D to a multiple of 8 in the wrapper so a small legal
        # tile always exists for huge D with awkward divisors.
        fitting = [min(legal)]

    align = max(_sublane(x_dtype), _sublane(out_dtype), _sublane(b_dtype))

    def score(t):
        dtype_aligned = (t % align == 0) or (t == D)
        even_steps = ((D // t) % 2 == 0) if want_two_steps else True
        return (dtype_aligned, even_steps, t)

    return max(fitting, key=score)


def _local_linear_kernel(x_ref, w_ref, b_ref, o_ref):
    # x_ref: (B, TD, I), w_ref: (TD, I, O), b_ref: (TD, O), o_ref: (B, TD, O)
    acc = jnp.einsum(
        "bdi,dio->bdo",
        x_ref[...],
        w_ref[...],
        preferred_element_type=jnp.float32,
    )
    acc = acc + b_ref[...].astype(jnp.float32)[None, :, :]
    o_ref[...] = acc.astype(o_ref.dtype)


def local_linear(x, weight, bias, *, stream_dtype=None):
    """x: [B, D, I], weight: [D, I, O], bias: [D, O] -> [B, D, O].

    stream_dtype: optional dtype (e.g. jnp.bfloat16) to cast weight/bias to
    before streaming; halves the dominant HBM weight traffic. Accumulation
    stays in f32 and the output keeps x.dtype.
    """
    B, D, I = x.shape
    Dw, Iw, O = weight.shape
    assert D == Dw and I == Iw and bias.shape == (D, O)

    if stream_dtype is not None:
        weight = weight.astype(stream_dtype)
        bias = bias.astype(stream_dtype)

    vmem_limit, tile_budget, want_two_steps = _vmem_plan()
    TD = _pick_td(D, B, I, O, x.dtype, weight.dtype, bias.dtype, x.dtype,
                  tile_budget, want_two_steps)

    cost = pl.CostEstimate(
        flops=2 * B * D * I * O,
        transcendentals=0,
        bytes_accessed=(D * I * O * weight.dtype.itemsize
                        + D * O * bias.dtype.itemsize
                        + B * D * I * x.dtype.itemsize
                        + B * D * O * x.dtype.itemsize),
    )

    return pl.pallas_call(
        _local_linear_kernel,
        out_shape=jax.ShapeDtypeStruct((B, D, O), x.dtype),
        grid_spec=pltpu.PrefetchScalarGridSpec(
            num_scalar_prefetch=0,
            grid=(D // TD,),
            in_specs=[
                pl.BlockSpec((B, TD, I), lambda d: (0, d, 0)),  # x, D-blocked in place
                pl.BlockSpec((TD, I, O), lambda d: (d, 0, 0)),  # weight stream (dominant DMA)
                pl.BlockSpec((TD, O), lambda d: (d, 0)),        # bias
            ],
            out_specs=pl.BlockSpec((B, TD, O), lambda d: (0, d, 0)),
        ),
        compiler_params=pltpu.CompilerParams(
            dimension_semantics=("parallel",),
            vmem_limit_bytes=vmem_limit,
        ),
        cost_estimate=cost,
    )(x, weight, bias)


def init_local_linear_params(key, num_dims, in_dim, out_dim, dtype=jnp.float32):
    # Matches nn.init.uniform_(-bound, bound) with bound = sqrt(1/in_dim).
    bound = (1.0 / in_dim) ** 0.5
    kw, kb = jax.random.split(key)
    weight = jax.random.uniform(
        kw, (num_dims, in_dim, out_dim), minval=-bound, maxval=bound, dtype=dtype
    )
    bias = jax.random.uniform(
        kb, (num_dims, out_dim), minval=-bound, maxval=bound, dtype=dtype
    )
    return weight, bias


if __name__ == "__main__":
    key = jax.random.PRNGKey(0)
    k_x, k_p = jax.random.split(key)

    batch, num_dims, in_dim, out_dim = 2, 4, 16, 32
    x = jax.random.normal(k_x, (batch, num_dims, in_dim), dtype=jnp.float32)
    weight, bias = init_local_linear_params(k_p, num_dims, in_dim, out_dim)

    out = local_linear(x, weight, bias)
    out = jax.block_until_ready(out)

    # Pure-JAX reference (same math as the PyTorch forward).
    ref = jnp.einsum("bdi,dio->bdo", x, weight) + bias[None, :, :]
    assert out.shape == (batch, num_dims, out_dim)
    assert jnp.allclose(out, ref, atol=1e-5, rtol=1e-5)

    print("KERNEL_OK")
</pallas_src>

<mosaic_0001>
module attributes {stable_mosaic.version = 11 : i64} {
  func.func @_local_linear_kernel(%arg0: i32, %arg1: memref<2x4x16xf32, #tpu.memory_space<vmem>>, %arg2: memref<4x16x32xf32, #tpu.memory_space<vmem>>, %arg3: memref<4x32xf32, #tpu.memory_space<vmem>>, %arg4: memref<2x4x32xf32, #tpu.memory_space<vmem>>) attributes {dimension_semantics = [#tpu.dimension_semantics<parallel>], iteration_bounds = array<i64: 1>, scalar_prefetch = 0 : i64, scratch_operands = 0 : i64, tpu.core_type = #tpu.core_type<tc>, window_params = [{transform_indices = @transform_0, window_bounds = array<i64: 2, 4, 16>}, {transform_indices = @transform_1, window_bounds = array<i64: 4, 16, 32>}, {transform_indices = @transform_2, window_bounds = array<i64: 4, 32>}, {transform_indices = @transform_3, window_bounds = array<i64: 2, 4, 32>}]} {
    %c0 = arith.constant 0 : index
    %c0_0 = arith.constant 0 : index
    %c0_1 = arith.constant 0 : index
    %0 = vector.load %arg1[%c0, %c0_0, %c0_1] : memref<2x4x16xf32, #tpu.memory_space<vmem>>, vector<2x4x16xf32>
    %c0_2 = arith.constant 0 : index
    %c0_3 = arith.constant 0 : index
    %c0_4 = arith.constant 0 : index
    %1 = vector.load %arg2[%c0_2, %c0_3, %c0_4] : memref<4x16x32xf32, #tpu.memory_space<vmem>>, vector<4x16x32xf32>
    "tpu.trace_start"() <{level = 10 : i32, message = "bdi,dio->bdo"}> : () -> ()
    %cst = arith.constant dense<0.000000e+00> : vector<4x32x2xf32>
    %2 = tpu.matmul %1, %0, %cst {dimension_numbers = #tpu.dot_dimension_numbers<[1], [2], [2], [0], [0, 0, 0, 2, 1, 0], [0], [1]>} : vector<4x16x32xf32>, vector<2x4x16xf32>, vector<4x32x2xf32> -> vector<4x32x2xf32>
    %3 = tpu.transpose %2, [2, 0, 1] : vector<4x32x2xf32> -> vector<2x4x32xf32>
    "tpu.trace_stop"() : () -> ()
    %c0_5 = arith.constant 0 : index
    %c0_6 = arith.constant 0 : index
    %4 = vector.load %arg3[%c0_5, %c0_6] : memref<4x32xf32, #tpu.memory_space<vmem>>, vector<4x32xf32>
    %5 = vector.shape_cast %4 : vector<4x32xf32> to vector<1x4x32xf32>
    %6 = vector.broadcast %5 : vector<1x4x32xf32> to vector<2x4x32xf32>
    %7 = arith.addf %3, %6 : vector<2x4x32xf32>
    %c0_7 = arith.constant 0 : index
    %c0_8 = arith.constant 0 : index
    %c0_9 = arith.constant 0 : index
    %8 = vector.load %arg4[%c0_7, %c0_8, %c0_9] : memref<2x4x32xf32, #tpu.memory_space<vmem>>, vector<2x4x32xf32>
    tpu.vector_store %arg4[%c0_7, %c0_8, %c0_9], %7 {strides = array<i32>} : memref<2x4x32xf32, #tpu.memory_space<vmem>>, vector<2x4x32xf32>,
    return
  }
  func.func @transform_0(%arg0: i32) -> (i32, i32, i32) {
    %c0_i32 = arith.constant 0 : i32
    %c0_i32_0 = arith.constant 0 : i32
    %c0_i32_1 = arith.constant 0 : i32
    return %c0_i32, %arg0, %c0_i32_0 : i32, i32, i32
  }
  func.func @transform_1(%arg0: i32) -> (i32, i32, i32) {
    %c0_i32 = arith.constant 0 : i32
    %c0_i32_0 = arith.constant 0 : i32
    %c0_i32_1 = arith.constant 0 : i32
    return %arg0, %c0_i32, %c0_i32_0 : i32, i32, i32
  }
  func.func @transform_2(%arg0: i32) -> (i32, i32) {
    %c0_i32 = arith.constant 0 : i32
    %c0_i32_0 = arith.constant 0 : i32
    return %arg0, %c0_i32 : i32, i32
  }
  func.func @transform_3(%arg0: i32) -> (i32, i32, i32) {
    %c0_i32 = arith.constant 0 : i32
    %c0_i32_0 = arith.constant 0 : i32
    %c0_i32_1 = arith.constant 0 : i32
    return %c0_i32, %arg0, %c0_i32_0 : i32, i32, i32
  }
}

</mosaic_0001>

<llo_original>
// kernel: tpu_custom_call.1
$region0: #{tpu_custom_call.1}
  #allocation0 [shape = 'u32[]', space=smem, size = 0x4, offset = 0x4, fixed_abs, tag = 'smem constant byte address 0x4 - core index']
  #allocation1 [shape = 'u32[72,128]{1,0:T(1,128)}', space=vmem, size = 0x9000, scoped, tag = 'internal scratch']
  %s0 = inlined_call_operand.hbm [shape: f32[2,4,16], index: 0, kind: input, shape index: {}]
  %s1 = inlined_call_operand.hbm [shape: f32[4,16,32], index: 1, kind: input, shape index: {}]
  %s2 = inlined_call_operand.hbm [shape: f32[4,32], index: 2, kind: input, shape index: {}]
  %s3 = inlined_call_operand.hbm [shape: f32[2,4,32], index: 3, kind: output, shape index: {}]
  %s4 = sld [smem:[#allocation0]]
  $region34: #{tpu_custom_call.1} parent=0
    _
  %s6 = ssub.s32 1, %s4
  %s7 = scalar_select 0, %s6, %s4
  $region1: #{tpu_custom_call.1} parent=0
    #allocation2 [shape = 'u8[4096]{0}', space=vmem, size = 0x1000, scoped, tag = 'input window, operand 0, single buffered']
    #allocation3 [shape = 's32[1]{0}', space=sflag, size = 0x4, scoped, tag = 'scoped memory for tpu_custom_call.1']
    #allocation4 [shape = 's32[1]{0}', space=sflag, size = 0x4, scoped, tag = 'scoped memory for tpu_custom_call.1']
    #allocation5 [shape = 'u8[32768]{0}', space=vmem, size = 0x8000, scoped, tag = 'input window, operand 1, single buffered']
    #allocation6 [shape = 's32[1]{0}', space=sflag, size = 0x4, scoped, tag = 'scoped memory for tpu_custom_call.1']
    #allocation7 [shape = 'u8[2048]{0}', space=vmem, size = 0x800, scoped, tag = 'input window, operand 2, single buffered']
    #allocation8 [shape = 'u8[4096]{0}', space=vmem, size = 0x1000, scoped, tag = 'output window, operand 0, single buffered']
    %8 = vsyncpa [#allocation3], 0
    %9 = vsyncpa [#allocation6], 0
    %10 = vsyncpa [#allocation4], 0
    // Predicated region
    $region2: #{tpu_custom_call.1} parent=1 // pred_check
      _
    $region3: #{tpu_custom_call.1} parent=1 // pred_check_branch
      %12 = sbr.rel (0) target = $region5
    $region4: #{tpu_custom_call.1} parent=1 // pred_region
      %14 = vsyncadd [#allocation3], 0
      %s15 = sshll.u32 %s0, 4
      %s16 = int_to_ptr.hbm [resolvable:$true] %s15
      %s17 = sshll.u32 [#allocation2], 4
      %s18 = int_to_ptr.vmem [resolvable:$true] %s17
      %23 = dma.hbm_to_vmem [thread:$0]  %s16, 128, %s18, [#allocation3], 64, 64, 4
    $region5: #{tpu_custom_call.1} parent=1 // pred_fallthru
      _
    // Predicated region
    $region6: #{tpu_custom_call.1} parent=1 // pred_check
      _
    $region7: #{tpu_custom_call.1} parent=1 // pred_check_branch
      %25 = sbr.rel (0) target = $region9
    $region8: #{tpu_custom_call.1} parent=1 // pred_region
      %27 = vsyncadd [#allocation6], 0
      %s28 = sshll.u32 %s1, 4
      %s29 = int_to_ptr.hbm [resolvable:$true] %s28
      %s30 = sshll.u32 [#allocation5], 4
      %s31 = int_to_ptr.vmem [resolvable:$true] %s30
      %36 = dma.hbm_to_vmem [thread:$0]  %s29, 1024, %s31, [#allocation6], 128, 128, 8
    $region9: #{tpu_custom_call.1} parent=1 // pred_fallthru
      _
    // Predicated region
    $region10: #{tpu_custom_call.1} parent=1 // pred_check
      _
    $region11: #{tpu_custom_call.1} parent=1 // pred_check_branch
      %38 = sbr.rel (0) target = $region13
    $region12: #{tpu_custom_call.1} parent=1 // pred_region
      %40 = vsyncadd [#allocation6], 0
      %s42 = sshll.u32 %s2, 4
      %s43 = int_to_ptr.hbm [resolvable:$true] %s42
      %s44 = sshll.u32 [#allocation7], 4
      %s45 = int_to_ptr.vmem [resolvable:$true] %s44
      %47 = dma.hbm_to_vmem [thread:$0]  %s43, 64, %s45, [#allocation6]
    $region13: #{tpu_custom_call.1} parent=1 // pred_fallthru
      _
    // Predicated region
    $region14: #{tpu_custom_call.1} parent=1 // pred_check
      _
    $region15: #{tpu_custom_call.1} parent=1 // pred_check_branch
      %49 = sbr.rel (0) target = $region17
    $region16: #{tpu_custom_call.1} parent=1 // pred_region
      %51 = dma.done [#allocation3], 128
    $region17: #{tpu_custom_call.1} parent=1 // pred_fallthru
      _
    // Predicated region
    $region18: #{tpu_custom_call.1} parent=1 // pred_check
      _
    $region19: #{tpu_custom_call.1} parent=1 // pred_check_branch
      %53 = sbr.rel (0) target = $region21
    $region20: #{tpu_custom_call.1} parent=1 // pred_region
      %55 = dma.done [#allocation6], 1024
    $region21: #{tpu_custom_call.1} parent=1 // pred_fallthru
      _
    // Predicated region
    $region22: #{tpu_custom_call.1} parent=1 // pred_check
      _
    $region23: #{tpu_custom_call.1} parent=1 // pred_check_branch
      %57 = sbr.rel (0) target = $region25
    $region24: #{tpu_custom_call.1} parent=1 // pred_region
      %59 = dma.done [#allocation6], 64
    $region25: #{tpu_custom_call.1} parent=1 // pred_fallthru
      _
    %v60 = vld [vmem:[#allocation2] sm:$0xf]
    %v61 = vld [vmem:[#allocation2 + $0x4] sm:$0xf]
    %v62 = vld [vmem:[#allocation5] sm:$0xff]
    %v63 = vld [vmem:[#allocation5 + $0x8] sm:$0xff]
    %v64 = vld [vmem:[#allocation5 + $0x10] sm:$0xff]
    %v65 = vld [vmem:[#allocation5 + $0x18] sm:$0xff]
    %v66 = vld [vmem:[#allocation5 + $0x20] sm:$0xff]
    %v67 = vld [vmem:[#allocation5 + $0x28] sm:$0xff]
    %v68 = vld [vmem:[#allocation5 + $0x30] sm:$0xff]
    %v69 = vld [vmem:[#allocation5 + $0x38] sm:$0xff]
    %70 = vxpose.xlu0.b32.start [1/16] %v60, 128
    %71 = vxpose.xlu0.b32.cont [2/16] 0.0, 128
    %72 = vxpose.xlu0.b32.cont [3/16] 0.0, 128
    %73 = vxpose.xlu0.b32.cont [4/16] 0.0, 128
    %74 = vxpose.xlu0.b32.cont [5/16] 0.0, 128
    %75 = vxpose.xlu0.b32.cont [6/16] 0.0, 128
    %76 = vxpose.xlu0.b32.cont [7/16] 0.0, 128
    %77 = vxpose.xlu0.b32.cont [8/16] 0.0, 128
    %78 = vxpose.xlu0.b32.cont [9/16] 0.0, 128
    %79 = vxpose.xlu0.b32.cont [10/16] 0.0, 128
    %80 = vxpose.xlu0.b32.cont [11/16] 0.0, 128
    %81 = vxpose.xlu0.b32.cont [12/16] 0.0, 128
    %82 = vxpose.xlu0.b32.cont [13/16] 0.0, 128
    %83 = vxpose.xlu0.b32.cont [14/16] 0.0, 128
    %84 = vxpose.xlu0.b32.cont [15/16] 0.0, 128
    %85 = vxpose.xlu0.b32.end [16/16] 0.0, 128
    %v86 = vpop.trf.xlu0
    %v87 = vpop.trf.xlu0
    %v88 = vpop.trf.xlu0
    %v89 = vpop.trf.xlu0
    %v90 = vpop.trf.xlu0
    %v91 = vpop.trf.xlu0
    %v92 = vpop.trf.xlu0
    %v93 = vpop.trf.xlu0
    %v94 = vpop.trf.xlu0
    %v95 = vpop.trf.xlu0
    %v96 = vpop.trf.xlu0
    %v97 = vpop.trf.xlu0
    %v98 = vpop.trf.xlu0
    %v99 = vpop.trf.xlu0
    %v100 = vpop.trf.xlu0
    %v101 = vpop.trf.xlu0
    %102 = vxpose.xlu0.b32.start [1/16] %v61, 128
    %103 = vxpose.xlu0.b32.cont [2/16] 0.0, 128
    %104 = vxpose.xlu0.b32.cont [3/16] 0.0, 128
    %105 = vxpose.xlu0.b32.cont [4/16] 0.0, 128
    %106 = vxpose.xlu0.b32.cont [5/16] 0.0, 128
    %107 = vxpose.xlu0.b32.cont [6/16] 0.0, 128
    %108 = vxpose.xlu0.b32.cont [7/16] 0.0, 128
    %109 = vxpose.xlu0.b32.cont [8/16] 0.0, 128
    %110 = vxpose.xlu0.b32.cont [9/16] 0.0, 128
    %111 = vxpose.xlu0.b32.cont [10/16] 0.0, 128
    %112 = vxpose.xlu0.b32.cont [11/16] 0.0, 128
    %113 = vxpose.xlu0.b32.cont [12/16] 0.0, 128
    %114 = vxpose.xlu0.b32.cont [13/16] 0.0, 128
    %115 = vxpose.xlu0.b32.cont [14/16] 0.0, 128
    %116 = vxpose.xlu0.b32.cont [15/16] 0.0, 128
    %117 = vxpose.xlu0.b32.end [16/16] 0.0, 128
    %v118 = vpop.trf.xlu0
    %v119 = vpop.trf.xlu0
    %v120 = vpop.trf.xlu0
    %v121 = vpop.trf.xlu0
    %v122 = vpop.trf.xlu0
    %v123 = vpop.trf.xlu0
    %v124 = vpop.trf.xlu0
    %v125 = vpop.trf.xlu0
    %v126 = vpop.trf.xlu0
    %v127 = vpop.trf.xlu0
    %v128 = vpop.trf.xlu0
    %v129 = vpop.trf.xlu0
    %v130 = vpop.trf.xlu0
    %v131 = vpop.trf.xlu0
    %v132 = vpop.trf.xlu0
    %v133 = vpop.trf.xlu0
    %v134 = vrot.slane %v86, 4
    %vm135 = vcmask 1047556
    %v136 = vsel %vm135, 0.0, %v134
    %v138 = vunpack.c.l.s4 1983009808
    %v139 = vunpack.c.0.s8 %v138
    %v140 = vperm.slane %v86, %v139
    %v142 = vunpack.c.l.s4 1983009808
    %v143 = vunpack.c.0.s8 %v142
    %v144 = vperm.slane %v136, %v143
    %v145 = vrot.slane %v118, 4
    %v146 = vsel %vm135, 0.0, %v145
    %v148 = vunpack.c.l.s4 1983009808
    %v149 = vunpack.c.0.s8 %v148
    %v150 = vperm.slane %v118, %v149
    %v152 = vunpack.c.l.s4 1983009808
    %v153 = vunpack.c.0.s8 %v152
    %v154 = vperm.slane %v146, %v153
    %v155 = vrot.slane %v150, 4
    %v156 = vsel %vm135, %v155, %v140
    %v157 = vrot.slane %v140, 4
    %v158 = vsel %vm135, %v150, %v157
    %v160 = vunpack.c.l.s4 1934713408
    %v161 = vunpack.c.0.s8 %v160
    %v162 = vperm.slane %v156, %v161
    %v164 = vunpack.c.l.s4 1934713408
    %v165 = vunpack.c.0.s8 %v164
    %v166 = vperm.slane %v158, %v165
    %v167 = vrot.slane %v154, 4
    %v168 = vsel %vm135, %v167, %v144
    %v169 = vrot.slane %v144, 4
    %v170 = vsel %vm135, %v154, %v169
    %v172 = vunpack.c.l.s4 1934713408
    %v173 = vunpack.c.0.s8 %v172
    %v174 = vperm.slane %v168, %v173
    %v176 = vunpack.c.l.s4 1934713408
    %v177 = vunpack.c.0.s8 %v176
    %v178 = vperm.slane %v170, %v177
    %v179 = vrot.slane %v162, 4
    %v180 = vsel %vm135, 0.0, %v179
    %v181 = vrot.slane %v166, 4
    %v182 = vsel %vm135, 0.0, %v181
    %v183 = vrot.slane %v174, 4
    %v184 = vsel %vm135, 0.0, %v183
    %v185 = vrot.slane %v178, 4
    %v186 = vsel %vm135, 0.0, %v185
    %v187 = vrot.slane %v87, 4
    %v188 = vsel %vm135, 0.0, %v187
    %v190 = vunpack.c.l.s4 1983009808
    %v191 = vunpack.c.0.s8 %v190
    %v192 = vperm.slane %v87, %v191
    %v194 = vunpack.c.l.s4 1983009808
    %v195 = vunpack.c.0.s8 %v194
    %v196 = vperm.slane %v188, %v195
    %v197 = vrot.slane %v119, 4
    %v198 = vsel %vm135, 0.0, %v197
    %v200 = vunpack.c.l.s4 1983009808
    %v201 = vunpack.c.0.s8 %v200
    %v202 = vperm.slane %v119, %v201
    %v204 = vunpack.c.l.s4 1983009808
    %v205 = vunpack.c.0.s8 %v204
    %v206 = vperm.slane %v198, %v205
    %v207 = vrot.slane %v202, 4
    %v208 = vsel %vm135, %v207, %v192
    %v209 = vrot.slane %v192, 4
    %v210 = vsel %vm135, %v202, %v209
    %v212 = vunpack.c.l.s4 1934713408
    %v213 = vunpack.c.0.s8 %v212
    %v214 = vperm.slane %v208, %v213
    %v216 = vunpack.c.l.s4 1934713408
    %v217 = vunpack.c.0.s8 %v216
    %v218 = vperm.slane %v210, %v217
    %v219 = vrot.slane %v206, 4
    %v220 = vsel %vm135, %v219, %v196
    %v221 = vrot.slane %v196, 4
    %v222 = vsel %vm135, %v206, %v221
    %v224 = vunpack.c.l.s4 1934713408
    %v225 = vunpack.c.0.s8 %v224
    %v226 = vperm.slane %v220, %v225
    %v228 = vunpack.c.l.s4 1934713408
    %v229 = vunpack.c.0.s8 %v228
    %v230 = vperm.slane %v222, %v229
    %v231 = vrot.slane %v214, 4
    %v232 = vsel %vm135, 0.0, %v231
    %v233 = vrot.slane %v218, 4
    %v234 = vsel %vm135, 0.0, %v233
    %v235 = vrot.slane %v226, 4
    %v236 = vsel %vm135, 0.0, %v235
    %v237 = vrot.slane %v230, 4
    %v238 = vsel %vm135, 0.0, %v237
    %239 = vxpose.xlu0.b32.start [1/16] %v162, 128
    %240 = vxpose.xlu0.b32.cont [2/16] 0.0, 128
    %241 = vxpose.xlu0.b32.cont [3/16] 0.0, 128
    %242 = vxpose.xlu0.b32.cont [4/16] 0.0, 128
    %243 = vxpose.xlu0.b32.cont [5/16] 0.0, 128
    %244 = vxpose.xlu0.b32.cont [6/16] 0.0, 128
    %245 = vxpose.xlu0.b32.cont [7/16] 0.0, 128
    %246 = vxpose.xlu0.b32.cont [8/16] 0.0, 128
    %247 = vxpose.xlu0.b32.cont [9/16] 0.0, 128
    %248 = vxpose.xlu0.b32.cont [10/16] 0.0, 128
    %249 = vxpose.xlu0.b32.cont [11/16] 0.0, 128
    %250 = vxpose.xlu0.b32.cont [12/16] 0.0, 128
    %251 = vxpose.xlu0.b32.cont [13/16] 0.0, 128
    %252 = vxpose.xlu0.b32.cont [14/16] 0.0, 128
    %253 = vxpose.xlu0.b32.cont [15/16] 0.0, 128
    %254 = vxpose.xlu0.b32.end [16/16] 0.0, 128
    %v255 = vpop.trf.xlu0
    %v256 = vpop.trf.xlu0
    %v257 = vpop.trf.xlu0
    %v258 = vpop.trf.xlu0
    %v259 = vpop.trf.xlu0
    %v260 = vpop.trf.xlu0
    %v261 = vpop.trf.xlu0
    %v262 = vpop.trf.xlu0
    %v263 = vpop.trf.xlu0
    %v264 = vpop.trf.xlu0
    %v265 = vpop.trf.xlu0
    %v266 = vpop.trf.xlu0
    %v267 = vpop.trf.xlu0
    %v268 = vpop.trf.xlu0
    %v269 = vpop.trf.xlu0
    %v270 = vpop.trf.xlu0
    %271 = vxpose.xlu0.b32.start [1/16] %v180, 128
    %272 = vxpose.xlu0.b32.cont [2/16] 0.0, 128
    %273 = vxpose.xlu0.b32.cont [3/16] 0.0, 128
    %274 = vxpose.xlu0.b32.cont [4/16] 0.0, 128
    %275 = vxpose.xlu0.b32.cont [5/16] 0.0, 128
    %276 = vxpose.xlu0.b32.cont [6/16] 0.0, 128
    %277 = vxpose.xlu0.b32.cont [7/16] 0.0, 128
    %278 = vxpose.xlu0.b32.cont [8/16] 0.0, 128
    %279 = vxpose.xlu0.b32.cont [9/16] 0.0, 128
    %280 = vxpose.xlu0.b32.cont [10/16] 0.0, 128
    %281 = vxpose.xlu0.b32.cont [11/16] 0.0, 128
    %282 = vxpose.xlu0.b32.cont [12/16] 0.0, 128
    %283 = vxpose.xlu0.b32.cont [13/16] 0.0, 128
    %284 = vxpose.xlu0.b32.cont [14/16] 0.0, 128
    %285 = vxpose.xlu0.b32.cont [15/16] 0.0, 128
    %286 = vxpose.xlu0.b32.end [16/16] 0.0, 128
    %v287 = vpop.trf.xlu0
    %v288 = vpop.trf.xlu0
    %v289 = vpop.trf.xlu0
    %v290 = vpop.trf.xlu0
    %v291 = vpop.trf.xlu0
    %v292 = vpop.trf.xlu0
    %v293 = vpop.trf.xlu0
    %v294 = vpop.trf.xlu0
    %v295 = vpop.trf.xlu0
    %v296 = vpop.trf.xlu0
    %v297 = vpop.trf.xlu0
    %v298 = vpop.trf.xlu0
    %v299 = vpop.trf.xlu0
    %v300 = vpop.trf.xlu0
    %v301 = vpop.trf.xlu0
    %v302 = vpop.trf.xlu0
    %303 = vxpose.xlu0.b32.start [1/16] %v166, 128
    %304 = vxpose.xlu0.b32.cont [2/16] 0.0, 128
    %305 = vxpose.xlu0.b32.cont [3/16] 0.0, 128
    %306 = vxpose.xlu0.b32.cont [4/16] 0.0, 128
    %307 = vxpose.xlu0.b32.cont [5/16] 0.0, 128
    %308 = vxpose.xlu0.b32.cont [6/16] 0.0, 128
    %309 = vxpose.xlu0.b32.cont [7/16] 0.0, 128
    %310 = vxpose.xlu0.b32.cont [8/16] 0.0, 128
    %311 = vxpose.xlu0.b32.cont [9/16] 0.0, 128
    %312 = vxpose.xlu0.b32.cont [10/16] 0.0, 128
    %313 = vxpose.xlu0.b32.cont [11/16] 0.0, 128
    %314 = vxpose.xlu0.b32.cont [12/16] 0.0, 128
    %315 = vxpose.xlu0.b32.cont [13/16] 0.0, 128
    %316 = vxpose.xlu0.b32.cont [14/16] 0.0, 128
    %317 = vxpose.xlu0.b32.cont [15/16] 0.0, 128
    %318 = vxpose.xlu0.b32.end [16/16] 0.0, 128
    %v319 = vpop.trf.xlu0
    %v320 = vpop.trf.xlu0
    %v321 = vpop.trf.xlu0
    %v322 = vpop.trf.xlu0
    %v323 = vpop.trf.xlu0
    %v324 = vpop.trf.xlu0
    %v325 = vpop.trf.xlu0
    %v326 = vpop.trf.xlu0
    %v327 = vpop.trf.xlu0
    %v328 = vpop.trf.xlu0
    %v329 = vpop.trf.xlu0
    %v330 = vpop.trf.xlu0
    %v331 = vpop.trf.xlu0
    %v332 = vpop.trf.xlu0
    %v333 = vpop.trf.xlu0
    %v334 = vpop.trf.xlu0
    %335 = vxpose.xlu0.b32.start [1/16] %v182, 128
    %336 = vxpose.xlu0.b32.cont [2/16] 0.0, 128
    %337 = vxpose.xlu0.b32.cont [3/16] 0.0, 128
    %338 = vxpose.xlu0.b32.cont [4/16] 0.0, 128
    %339 = vxpose.xlu0.b32.cont [5/16] 0.0, 128
    %340 = vxpose.xlu0.b32.cont [6/16] 0.0, 128
    %341 = vxpose.xlu0.b32.cont [7/16] 0.0, 128
    %342 = vxpose.xlu0.b32.cont [8/16] 0.0, 128
    %343 = vxpose.xlu0.b32.cont [9/16] 0.0, 128
    %344 = vxpose.xlu0.b32.cont [10/16] 0.0, 128
    %345 = vxpose.xlu0.b32.cont [11/16] 0.0, 128
    %346 = vxpose.xlu0.b32.cont [12/16] 0.0, 128
    %347 = vxpose.xlu0.b32.cont [13/16] 0.0, 128
    %348 = vxpose.xlu0.b32.cont [14/16] 0.0, 128
    %349 = vxpose.xlu0.b32.cont [15/16] 0.0, 128
    %350 = vxpose.xlu0.b32.end [16/16] 0.0, 128
    %v351 = vpop.trf.xlu0
    %v352 = vpop.trf.xlu0
    %v353 = vpop.trf.xlu0
    %v354 = vpop.trf.xlu0
    %v355 = vpop.trf.xlu0
    %v356 = vpop.trf.xlu0
    %v357 = vpop.trf.xlu0
    %v358 = vpop.trf.xlu0
    %v359 = vpop.trf.xlu0
    %v360 = vpop.trf.xlu0
    %v361 = vpop.trf.xlu0
    %v362 = vpop.trf.xlu0
    %v363 = vpop.trf.xlu0
    %v364 = vpop.trf.xlu0
    %v365 = vpop.trf.xlu0
    %v366 = vpop.trf.xlu0
    %367 = vxpose.xlu0.b32.start [1/16] %v174, 128
    %368 = vxpose.xlu0.b32.cont [2/16] 0.0, 128
    %369 = vxpose.xlu0.b32.cont [3/16] 0.0, 128
    %370 = vxpose.xlu0.b32.cont [4/16] 0.0, 128
    %371 = vxpose.xlu0.b32.cont [5/16] 0.0, 128
    %372 = vxpose.xlu0.b32.cont [6/16] 0.0, 128
    %373 = vxpose.xlu0.b32.cont [7/16] 0.0, 128
    %374 = vxpose.xlu0.b32.cont [8/16] 0.0, 128
    %375 = vxpose.xlu0.b32.cont [9/16] 0.0, 128
    %376 = vxpose.xlu0.b32.cont [10/16] 0.0, 128
    %377 = vxpose.xlu0.b32.cont [11/16] 0.0, 128
    %378 = vxpose.xlu0.b32.cont [12/16] 0.0, 128
    %379 = vxpose.xlu0.b32.cont [13/16] 0.0, 128
    %380 = vxpose.xlu0.b32.cont [14/16] 0.0, 128
    %381 = vxpose.xlu0.b32.cont [15/16] 0.0, 128
    %382 = vxpose.xlu0.b32.end [16/16] 0.0, 128
    %v383 = vpop.trf.xlu0
    %v384 = vpop.trf.xlu0
    %v385 = vpop.trf.xlu0
    %v386 = vpop.trf.xlu0
    %v387 = vpop.trf.xlu0
    %v388 = vpop.trf.xlu0
    %v389 = vpop.trf.xlu0
    %v390 = vpop.trf.xlu0
    %v391 = vpop.trf.xlu0
    %v392 = vpop.trf.xlu0
    %v393 = vpop.trf.xlu0
    %v394 = vpop.trf.xlu0
    %v395 = vpop.trf.xlu0
    %v396 = vpop.trf.xlu0
    %v397 = vpop.trf.xlu0
    %v398 = vpop.trf.xlu0
    %399 = vxpose.xlu0.b32.start [1/16] %v184, 128
    %400 = vxpose.xlu0.b32.cont [2/16] 0.0, 128
    %401 = vxpose.xlu0.b32.cont [3/16] 0.0, 128
    %402 = vxpose.xlu0.b32.cont [4/16] 0.0, 128
    %403 = vxpose.xlu0.b32.cont [5/16] 0.0, 128
    %404 = vxpose.xlu0.b32.cont [6/16] 0.0, 128
    %405 = vxpose.xlu0.b32.cont [7/16] 0.0, 128
    %406 = vxpose.xlu0.b32.cont [8/16] 0.0, 128
    %407 = vxpose.xlu0.b32.cont [9/16] 0.0, 128
    %408 = vxpose.xlu0.b32.cont [10/16] 0.0, 128
    %409 = vxpose.xlu0.b32.cont [11/16] 0.0, 128
    %410 = vxpose.xlu0.b32.cont [12/16] 0.0, 128
    %411 = vxpose.xlu0.b32.cont [13/16] 0.0, 128
    %412 = vxpose.xlu0.b32.cont [14/16] 0.0, 128
    %413 = vxpose.xlu0.b32.cont [15/16] 0.0, 128
    %414 = vxpose.xlu0.b32.end [16/16] 0.0, 128
    %v415 = vpop.trf.xlu0
    %v416 = vpop.trf.xlu0
    %v417 = vpop.trf.xlu0
    %v418 = vpop.trf.xlu0
    %v419 = vpop.trf.xlu0
    %v420 = vpop.trf.xlu0
    %v421 = vpop.trf.xlu0
    %v422 = vpop.trf.xlu0
    %v423 = vpop.trf.xlu0
    %v424 = vpop.trf.xlu0
    %v425 = vpop.trf.xlu0
    %v426 = vpop.trf.xlu0
    %v427 = vpop.trf.xlu0
    %v428 = vpop.trf.xlu0
    %v429 = vpop.trf.xlu0
    %v430 = vpop.trf.xlu0
    %431 = vxpose.xlu0.b32.start [1/16] %v178, 128
    %432 = vxpose.xlu0.b32.cont [2/16] 0.0, 128
    %433 = vxpose.xlu0.b32.cont [3/16] 0.0, 128
    %434 = vxpose.xlu0.b32.cont [4/16] 0.0, 128
    %435 = vxpose.xlu0.b32.cont [5/16] 0.0, 128
    %436 = vxpose.xlu0.b32.cont [6/16] 0.0, 128
    %437 = vxpose.xlu0.b32.cont [7/16] 0.0, 128
    %438 = vxpose.xlu0.b32.cont [8/16] 0.0, 128
    %439 = vxpose.xlu0.b32.cont [9/16] 0.0, 128
    %440 = vxpose.xlu0.b32.cont [10/16] 0.0, 128
    %441 = vxpose.xlu0.b32.cont [11/16] 0.0, 128
    %442 = vxpose.xlu0.b32.cont [12/16] 0.0, 128
    %443 = vxpose.xlu0.b32.cont [13/16] 0.0, 128
    %444 = vxpose.xlu0.b32.cont [14/16] 0.0, 128
    %445 = vxpose.xlu0.b32.cont [15/16] 0.0, 128
    %446 = vxpose.xlu0.b32.end [16/16] 0.0, 128
    %v447 = vpop.trf.xlu0
    %v448 = vpop.trf.xlu0
    %v449 = vpop.trf.xlu0
    %v450 = vpop.trf.xlu0
    %v451 = vpop.trf.xlu0
    %v452 = vpop.trf.xlu0
    %v453 = vpop.trf.xlu0
    %v454 = vpop.trf.xlu0
    %v455 = vpop.trf.xlu0
    %v456 = vpop.trf.xlu0
    %v457 = vpop.trf.xlu0
    %v458 = vpop.trf.xlu0
    %v459 = vpop.trf.xlu0
    %v460 = vpop.trf.xlu0
    %v461 = vpop.trf.xlu0
    %v462 = vpop.trf.xlu0
    %463 = vxpose.xlu0.b32.start [1/16] %v186, 128
    %464 = vxpose.xlu0.b32.cont [2/16] 0.0, 128
    %465 = vxpose.xlu0.b32.cont [3/16] 0.0, 128
    %466 = vxpose.xlu0.b32.cont [4/16] 0.0, 128
    %467 = vxpose.xlu0.b32.cont [5/16] 0.0, 128
    %468 = vxpose.xlu0.b32.cont [6/16] 0.0, 128
    %469 = vxpose.xlu0.b32.cont [7/16] 0.0, 128
    %470 = vxpose.xlu0.b32.cont [8/16] 0.0, 128
    %471 = vxpose.xlu0.b32.cont [9/16] 0.0, 128
    %472 = vxpose.xlu0.b32.cont [10/16] 0.0, 128
    %473 = vxpose.xlu0.b32.cont [11/16] 0.0, 128
    %474 = vxpose.xlu0.b32.cont [12/16] 0.0, 128
    %475 = vxpose.xlu0.b32.cont [13/16] 0.0, 128
    %476 = vxpose.xlu0.b32.cont [14/16] 0.0, 128
    %477 = vxpose.xlu0.b32.cont [15/16] 0.0, 128
    %478 = vxpose.xlu0.b32.end [16/16] 0.0, 128
    %v479 = vpop.trf.xlu0
    %v480 = vpop.trf.xlu0
    %v481 = vpop.trf.xlu0
    %v482 = vpop.trf.xlu0
    %v483 = vpop.trf.xlu0
    %v484 = vpop.trf.xlu0
    %v485 = vpop.trf.xlu0
    %v486 = vpop.trf.xlu0
    %v487 = vpop.trf.xlu0
    %v488 = vpop.trf.xlu0
    %v489 = vpop.trf.xlu0
    %v490 = vpop.trf.xlu0
    %v491 = vpop.trf.xlu0
    %v492 = vpop.trf.xlu0
    %v493 = vpop.trf.xlu0
    %v494 = vpop.trf.xlu0
    %495 = vxpose.xlu0.b32.start [1/16] %v214, 128
    %496 = vxpose.xlu0.b32.cont [2/16] 0.0, 128
    %497 = vxpose.xlu0.b32.cont [3/16] 0.0, 128
    %498 = vxpose.xlu0.b32.cont [4/16] 0.0, 128
    %499 = vxpose.xlu0.b32.cont [5/16] 0.0, 128
    %500 = vxpose.xlu0.b32.cont [6/16] 0.0, 128
    %501 = vxpose.xlu0.b32.cont [7/16] 0.0, 128
    %502 = vxpose.xlu0.b32.cont [8/16] 0.0, 128
    %503 = vxpose.xlu0.b32.cont [9/16] 0.0, 128
    %504 = vxpose.xlu0.b32.cont [10/16] 0.0, 128
    %505 = vxpose.xlu0.b32.cont [11/16] 0.0, 128
    %506 = vxpose.xlu0.b32.cont [12/16] 0.0, 128
    %507 = vxpose.xlu0.b32.cont [13/16] 0.0, 128
    %508 = vxpose.xlu0.b32.cont [14/16] 0.0, 128
    %509 = vxpose.xlu0.b32.cont [15/16] 0.0, 128
    %510 = vxpose.xlu0.b32.end [16/16] 0.0, 128
    %v511 = vpop.trf.xlu0
    %v512 = vpop.trf.xlu0
    %v513 = vpop.trf.xlu0
    %v514 = vpop.trf.xlu0
    %v515 = vpop.trf.xlu0
    %v516 = vpop.trf.xlu0
    %v517 = vpop.trf.xlu0
    %v518 = vpop.trf.xlu0
    %v519 = vpop.trf.xlu0
    %v520 = vpop.trf.xlu0
    %v521 = vpop.trf.xlu0
    %v522 = vpop.trf.xlu0
    %v523 = vpop.trf.xlu0
    %v524 = vpop.trf.xlu0
    %v525 = vpop.trf.xlu0
    %v526 = vpop.trf.xlu0
    %527 = vxpose.xlu0.b32.start [1/16] %v232, 128
    %528 = vxpose.xlu0.b32.cont [2/16] 0.0, 128
    %529 = vxpose.xlu0.b32.cont [3/16] 0.0, 128
    %530 = vxpose.xlu0.b32.cont [4/16] 0.0, 128
    %531 = vxpose.xlu0.b32.cont [5/16] 0.0, 128
    %532 = vxpose.xlu0.b32.cont [6/16] 0.0, 128
    %533 = vxpose.xlu0.b32.cont [7/16] 0.0, 128
    %534 = vxpose.xlu0.b32.cont [8/16] 0.0, 128
    %535 = vxpose.xlu0.b32.cont [9/16] 0.0, 128
    %536 = vxpose.xlu0.b32.cont [10/16] 0.0, 128
    %537 = vxpose.xlu0.b32.cont [11/16] 0.0, 128
    %538 = vxpose.xlu0.b32.cont [12/16] 0.0, 128
    %539 = vxpose.xlu0.b32.cont [13/16] 0.0, 128
    %540 = vxpose.xlu0.b32.cont [14/16] 0.0, 128
    %541 = vxpose.xlu0.b32.cont [15/16] 0.0, 128
    %542 = vxpose.xlu0.b32.end [16/16] 0.0, 128
    %v543 = vpop.trf.xlu0
    %v544 = vpop.trf.xlu0
    %v545 = vpop.trf.xlu0
    %v546 = vpop.trf.xlu0
    %v547 = vpop.trf.xlu0
    %v548 = vpop.trf.xlu0
    %v549 = vpop.trf.xlu0
    %v550 = vpop.trf.xlu0
    %v551 = vpop.trf.xlu0
    %v552 = vpop.trf.xlu0
    %v553 = vpop.trf.xlu0
    %v554 = vpop.trf.xlu0
    %v555 = vpop.trf.xlu0
    %v556 = vpop.trf.xlu0
    %v557 = vpop.trf.xlu0
    %v558 = vpop.trf.xlu0
    %559 = vxpose.xlu0.b32.start [1/16] %v218, 128
    %560 = vxpose.xlu0.b32.cont [2/16] 0.0, 128
    %561 = vxpose.xlu0.b32.cont [3/16] 0.0, 128
    %562 = vxpose.xlu0.b32.cont [4/16] 0.0, 128
    %563 = vxpose.xlu0.b32.cont [5/16] 0.0, 128
    %564 = vxpose.xlu0.b32.cont [6/16] 0.0, 128
    %565 = vxpose.xlu0.b32.cont [7/16] 0.0, 128
    %566 = vxpose.xlu0.b32.cont [8/16] 0.0, 128
    %567 = vxpose.xlu0.b32.cont [9/16] 0.0, 128
    %568 = vxpose.xlu0.b32.cont [10/16] 0.0, 128
    %569 = vxpose.xlu0.b32.cont [11/16] 0.0, 128
    %570 = vxpose.xlu0.b32.cont [12/16] 0.0, 128
    %571 = vxpose.xlu0.b32.cont [13/16] 0.0, 128
    %572 = vxpose.xlu0.b32.cont [14/16] 0.0, 128
    %573 = vxpose.xlu0.b32.cont [15/16] 0.0, 128
    %574 = vxpose.xlu0.b32.end [16/16] 0.0, 128
    %v575 = vpop.trf.xlu0
    %v576 = vpop.trf.xlu0
    %v577 = vpop.trf.xlu0
    %v578 = vpop.trf.xlu0
    %v579 = vpop.trf.xlu0
    %v580 = vpop.trf.xlu0
    %v581 = vpop.trf.xlu0
    %v582 = vpop.trf.xlu0
    %v583 = vpop.trf.xlu0
    %v584 = vpop.trf.xlu0
    %v585 = vpop.trf.xlu0
    %v586 = vpop.trf.xlu0
    %v587 = vpop.trf.xlu0
    %v588 = vpop.trf.xlu0
    %v589 = vpop.trf.xlu0
    %v590 = vpop.trf.xlu0
    %591 = vxpose.xlu0.b32.start [1/16] %v234, 128
    %592 = vxpose.xlu0.b32.cont [2/16] 0.0, 128
    %593 = vxpose.xlu0.b32.cont [3/16] 0.0, 128
    %594 = vxpose.xlu0.b32.cont [4/16] 0.0, 128
    %595 = vxpose.xlu0.b32.cont [5/16] 0.0, 128
    %596 = vxpose.xlu0.b32.cont [6/16] 0.0, 128
    %597 = vxpose.xlu0.b32.cont [7/16] 0.0, 128
    %598 = vxpose.xlu0.b32.cont [8/16] 0.0, 128
    %599 = vxpose.xlu0.b32.cont [9/16] 0.0, 128
    %600 = vxpose.xlu0.b32.cont [10/16] 0.0, 128
    %601 = vxpose.xlu0.b32.cont [11/16] 0.0, 128
    %602 = vxpose.xlu0.b32.cont [12/16] 0.0, 128
    %603 = vxpose.xlu0.b32.cont [13/16] 0.0, 128
    %604 = vxpose.xlu0.b32.cont [14/16] 0.0, 128
    %605 = vxpose.xlu0.b32.cont [15/16] 0.0, 128
    %606 = vxpose.xlu0.b32.end [16/16] 0.0, 128
    %v607 = vpop.trf.xlu0
    %v608 = vpop.trf.xlu0
    %v609 = vpop.trf.xlu0
    %v610 = vpop.trf.xlu0
    %v611 = vpop.trf.xlu0
    %v612 = vpop.trf.xlu0
    %v613 = vpop.trf.xlu0
    %v614 = vpop.trf.xlu0
    %v615 = vpop.trf.xlu0
    %v616 = vpop.trf.xlu0
    %v617 = vpop.trf.xlu0
    %v618 = vpop.trf.xlu0
    %v619 = vpop.trf.xlu0
    %v620 = vpop.trf.xlu0
    %v621 = vpop.trf.xlu0
    %v622 = vpop.trf.xlu0
    %623 = vxpose.xlu0.b32.start [1/16] %v226, 128
    %624 = vxpose.xlu0.b32.cont [2/16] 0.0, 128
    %625 = vxpose.xlu0.b32.cont [3/16] 0.0, 128
    %626 = vxpose.xlu0.b32.cont [4/16] 0.0, 128
    %627 = vxpose.xlu0.b32.cont [5/16] 0.0, 128
    %628 = vxpose.xlu0.b32.cont [6/16] 0.0, 128
    %629 = vxpose.xlu0.b32.cont [7/16] 0.0, 128
    %630 = vxpose.xlu0.b32.cont [8/16] 0.0, 128
    %631 = vxpose.xlu0.b32.cont [9/16] 0.0, 128
    %632 = vxpose.xlu0.b32.cont [10/16] 0.0, 128
    %633 = vxpose.xlu0.b32.cont [11/16] 0.0, 128
    %634 = vxpose.xlu0.b32.cont [12/16] 0.0, 128
    %635 = vxpose.xlu0.b32.cont [13/16] 0.0, 128
    %636 = vxpose.xlu0.b32.cont [14/16] 0.0, 128
    %637 = vxpose.xlu0.b32.cont [15/16] 0.0, 128
    %638 = vxpose.xlu0.b32.end [16/16] 0.0, 128
    %v639 = vpop.trf.xlu0
    %v640 = vpop.trf.xlu0
    %v641 = vpop.trf.xlu0
    %v642 = vpop.trf.xlu0
    %v643 = vpop.trf.xlu0
    %v644 = vpop.trf.xlu0
    %v645 = vpop.trf.xlu0
    %v646 = vpop.trf.xlu0
    %v647 = vpop.trf.xlu0
    %v648 = vpop.trf.xlu0
    %v649 = vpop.trf.xlu0
    %v650 = vpop.trf.xlu0
    %v651 = vpop.trf.xlu0
    %v652 = vpop.trf.xlu0
    %v653 = vpop.trf.xlu0
    %v654 = vpop.trf.xlu0
    %655 = vxpose.xlu0.b32.start [1/16] %v236, 128
    %656 = vxpose.xlu0.b32.cont [2/16] 0.0, 128
    %657 = vxpose.xlu0.b32.cont [3/16] 0.0, 128
    %658 = vxpose.xlu0.b32.cont [4/16] 0.0, 128
    %659 = vxpose.xlu0.b32.cont [5/16] 0.0, 128
    %660 = vxpose.xlu0.b32.cont [6/16] 0.0, 128
    %661 = vxpose.xlu0.b32.cont [7/16] 0.0, 128
    %662 = vxpose.xlu0.b32.cont [8/16] 0.0, 128
    %663 = vxpose.xlu0.b32.cont [9/16] 0.0, 128
    %664 = vxpose.xlu0.b32.cont [10/16] 0.0, 128
    %665 = vxpose.xlu0.b32.cont [11/16] 0.0, 128
    %666 = vxpose.xlu0.b32.cont [12/16] 0.0, 128
    %667 = vxpose.xlu0.b32.cont [13/16] 0.0, 128
    %668 = vxpose.xlu0.b32.cont [14/16] 0.0, 128
    %669 = vxpose.xlu0.b32.cont [15/16] 0.0, 128
    %670 = vxpose.xlu0.b32.end [16/16] 0.0, 128
    %v671 = vpop.trf.xlu0
    %v672 = vpop.trf.xlu0
    %v673 = vpop.trf.xlu0
    %v674 = vpop.trf.xlu0
    %v675 = vpop.trf.xlu0
    %v676 = vpop.trf.xlu0
    %v677 = vpop.trf.xlu0
    %v678 = vpop.trf.xlu0
    %v679 = vpop.trf.xlu0
    %v680 = vpop.trf.xlu0
    %v681 = vpop.trf.xlu0
    %v682 = vpop.trf.xlu0
    %v683 = vpop.trf.xlu0
    %v684 = vpop.trf.xlu0
    %v685 = vpop.trf.xlu0
    %v686 = vpop.trf.xlu0
    %687 = vxpose.xlu0.b32.start [1/16] %v230, 128
    %688 = vxpose.xlu0.b32.cont [2/16] 0.0, 128
    %689 = vxpose.xlu0.b32.cont [3/16] 0.0, 128
    %690 = vxpose.xlu0.b32.cont [4/16] 0.0, 128
    %691 = vxpose.xlu0.b32.cont [5/16] 0.0, 128
    %692 = vxpose.xlu0.b32.cont [6/16] 0.0, 128
    %693 = vxpose.xlu0.b32.cont [7/16] 0.0, 128
    %694 = vxpose.xlu0.b32.cont [8/16] 0.0, 128
    %695 = vxpose.xlu0.b32.cont [9/16] 0.0, 128
    %696 = vxpose.xlu0.b32.cont [10/16] 0.0, 128
    %697 = vxpose.xlu0.b32.cont [11/16] 0.0, 128
    %698 = vxpose.xlu0.b32.cont [12/16] 0.0, 128
    %699 = vxpose.xlu0.b32.cont [13/16] 0.0, 128
    %700 = vxpose.xlu0.b32.cont [14/16] 0.0, 128
    %701 = vxpose.xlu0.b32.cont [15/16] 0.0, 128
    %702 = vxpose.xlu0.b32.end [16/16] 0.0, 128
    %v703 = vpop.trf.xlu0
    %v704 = vpop.trf.xlu0
    %v705 = vpop.trf.xlu0
    %v706 = vpop.trf.xlu0
    %v707 = vpop.trf.xlu0
    %v708 = vpop.trf.xlu0
    %v709 = vpop.trf.xlu0
    %v710 = vpop.trf.xlu0
    %v711 = vpop.trf.xlu0
    %v712 = vpop.trf.xlu0
    %v713 = vpop.trf.xlu0
    %v714 = vpop.trf.xlu0
    %v715 = vpop.trf.xlu0
    %v716 = vpop.trf.xlu0
    %v717 = vpop.trf.xlu0
    %v718 = vpop.trf.xlu0
    %719 = vxpose.xlu0.b32.start [1/16] %v238, 128
    %720 = vxpose.xlu0.b32.cont [2/16] 0.0, 128
    %721 = vxpose.xlu0.b32.cont [3/16] 0.0, 128
    %722 = vxpose.xlu0.b32.cont [4/16] 0.0, 128
    %723 = vxpose.xlu0.b32.cont [5/16] 0.0, 128
    %724 = vxpose.xlu0.b32.cont [6/16] 0.0, 128
    %725 = vxpose.xlu0.b32.cont [7/16] 0.0, 128
    %726 = vxpose.xlu0.b32.cont [8/16] 0.0, 128
    %727 = vxpose.xlu0.b32.cont [9/16] 0.0, 128
    %728 = vxpose.xlu0.b32.cont [10/16] 0.0, 128
    %729 = vxpose.xlu0.b32.cont [11/16] 0.0, 128
    %730 = vxpose.xlu0.b32.cont [12/16] 0.0, 128
    %731 = vxpose.xlu0.b32.cont [13/16] 0.0, 128
    %732 = vxpose.xlu0.b32.cont [14/16] 0.0, 128
    %733 = vxpose.xlu0.b32.cont [15/16] 0.0, 128
    %734 = vxpose.xlu0.b32.end [16/16] 0.0, 128
    %v735 = vpop.trf.xlu0
    %v736 = vpop.trf.xlu0
    %v737 = vpop.trf.xlu0
    %v738 = vpop.trf.xlu0
    %v739 = vpop.trf.xlu0
    %v740 = vpop.trf.xlu0
    %v741 = vpop.trf.xlu0
    %v742 = vpop.trf.xlu0
    %v743 = vpop.trf.xlu0
    %v744 = vpop.trf.xlu0
    %v745 = vpop.trf.xlu0
    %v746 = vpop.trf.xlu0
    %v747 = vpop.trf.xlu0
    %v748 = vpop.trf.xlu0
    %v749 = vpop.trf.xlu0
    %v750 = vpop.trf.xlu0
    %v751 = vrot.slane %v319, 4
    %v752 = vsel %vm135, %v751, %v255
    %v754 = vunpack.c.l.s4 1983009808
    %v755 = vunpack.c.0.s8 %v754
    %v756 = vperm.slane %v752, %v755
    %v757 = vrot.slane %v351, 4
    %v758 = vsel %vm135, %v757, %v287
    %v760 = vunpack.c.l.s4 1983009808
    %v761 = vunpack.c.0.s8 %v760
    %v762 = vperm.slane %v758, %v761
    %v763 = vrot.slane %v447, 4
    %v764 = vsel %vm135, %v763, %v383
    %v766 = vunpack.c.l.s4 1983009808
    %v767 = vunpack.c.0.s8 %v766
    %v768 = vperm.slane %v764, %v767
    %v769 = vrot.slane %v479, 4
    %v770 = vsel %vm135, %v769, %v415
    %v772 = vunpack.c.l.s4 1983009808
    %v773 = vunpack.c.0.s8 %v772
    %v774 = vperm.slane %v770, %v773
    %v775 = vrot.slane %v762, 4
    %v776 = vsel %vm135, %v775, %v756
    %v777 = vrot.slane %v756, 4
    %v778 = vsel %vm135, %v762, %v777
    %v780 = vunpack.c.l.s4 1934713408
    %v781 = vunpack.c.0.s8 %v780
    %v782 = vperm.slane %v776, %v781
    %v784 = vunpack.c.l.s4 1934713408
    %v785 = vunpack.c.0.s8 %v784
    %v786 = vperm.slane %v778, %v785
    %v787 = vrot.slane %v774, 4
    %v788 = vsel %vm135, %v787, %v768
    %v789 = vrot.slane %v768, 4
    %v790 = vsel %vm135, %v774, %v789
    %v792 = vunpack.c.l.s4 1934713408
    %v793 = vunpack.c.0.s8 %v792
    %v794 = vperm.slane %v788, %v793
    %v796 = vunpack.c.l.s4 1934713408
    %v797 = vunpack.c.0.s8 %v796
    %v798 = vperm.slane %v790, %v797
    %v799 = vrot.slane %v794, 4
    %v800 = vsel %vm135, %v799, %v782
    %v801 = vrot.slane %v782, 4
    %v802 = vsel %vm135, %v794, %v801
    %v803 = vrot.slane %v798, 4
    %v804 = vsel %vm135, %v803, %v786
    %v805 = vrot.slane %v786, 4
    %v806 = vsel %vm135, %v798, %v805
    %v807 = vrot.slane %v575, 4
    %v808 = vsel %vm135, %v807, %v511
    %v810 = vunpack.c.l.s4 1983009808
    %v811 = vunpack.c.0.s8 %v810
    %v812 = vperm.slane %v808, %v811
    %v813 = vrot.slane %v607, 4
    %v814 = vsel %vm135, %v813, %v543
    %v816 = vunpack.c.l.s4 1983009808
    %v817 = vunpack.c.0.s8 %v816
    %v818 = vperm.slane %v814, %v817
    %v819 = vrot.slane %v703, 4
    %v820 = vsel %vm135, %v819, %v639
    %v822 = vunpack.c.l.s4 1983009808
    %v823 = vunpack.c.0.s8 %v822
    %v824 = vperm.slane %v820, %v823
    %v825 = vrot.slane %v735, 4
    %v826 = vsel %vm135, %v825, %v671
    %v828 = vunpack.c.l.s4 1983009808
    %v829 = vunpack.c.0.s8 %v828
    %v830 = vperm.slane %v826, %v829
    %v831 = vrot.slane %v818, 4
    %v832 = vsel %vm135, %v831, %v812
    %v833 = vrot.slane %v812, 4
    %v834 = vsel %vm135, %v818, %v833
    %v836 = vunpack.c.l.s4 1934713408
    %v837 = vunpack.c.0.s8 %v836
    %v838 = vperm.slane %v832, %v837
    %v840 = vunpack.c.l.s4 1934713408
    %v841 = vunpack.c.0.s8 %v840
    %v842 = vperm.slane %v834, %v841
    %v843 = vrot.slane %v830, 4
    %v844 = vsel %vm135, %v843, %v824
    %v845 = vrot.slane %v824, 4
    %v846 = vsel %vm135, %v830, %v845
    %v848 = vunpack.c.l.s4 1934713408
    %v849 = vunpack.c.0.s8 %v848
    %v850 = vperm.slane %v844, %v849
    %v852 = vunpack.c.l.s4 1934713408
    %v853 = vunpack.c.0.s8 %v852
    %v854 = vperm.slane %v846, %v853
    %v855 = vrot.slane %v850, 4
    %v856 = vsel %vm135, %v855, %v838
    %v857 = vrot.slane %v838, 4
    %v858 = vsel %vm135, %v850, %v857
    %v859 = vrot.slane %v854, 4
    %v860 = vsel %vm135, %v859, %v842
    %v861 = vrot.slane %v842, 4
    %v862 = vsel %vm135, %v854, %v861
    %863 = vxpose.xlu0.b32.start [1/16] %v62, 128
    %864 = vxpose.xlu0.b32.cont [2/16] %v63, 128
    %865 = vxpose.xlu0.b32.cont [3/16] 0.0, 128
    %866 = vxpose.xlu0.b32.cont [4/16] 0.0, 128
    %867 = vxpose.xlu0.b32.cont [5/16] 0.0, 128
    %868 = vxpose.xlu0.b32.cont [6/16] 0.0, 128
    %869 = vxpose.xlu0.b32.cont [7/16] 0.0, 128
    %870 = vxpose.xlu0.b32.cont [8/16] 0.0, 128
    %871 = vxpose.xlu0.b32.cont [9/16] 0.0, 128
    %872 = vxpose.xlu0.b32.cont [10/16] 0.0, 128
    %873 = vxpose.xlu0.b32.cont [11/16] 0.0, 128
    %874 = vxpose.xlu0.b32.cont [12/16] 0.0, 128
    %875 = vxpose.xlu0.b32.cont [13/16] 0.0, 128
    %876 = vxpose.xlu0.b32.cont [14/16] 0.0, 128
    %877 = vxpose.xlu0.b32.cont [15/16] 0.0, 128
    %878 = vxpose.xlu0.b32.end [16/16] 0.0, 128
    %v879 = vpop.trf.xlu0
    %v880 = vpop.trf.xlu0
    %v881 = vpop.trf.xlu0
    %v882 = vpop.trf.xlu0
    %v883 = vpop.trf.xlu0
    %v884 = vpop.trf.xlu0
    %v885 = vpop.trf.xlu0
    %v886 = vpop.trf.xlu0
    %v887 = vpop.trf.xlu0
    %v888 = vpop.trf.xlu0
    %v889 = vpop.trf.xlu0
    %v890 = vpop.trf.xlu0
    %v891 = vpop.trf.xlu0
    %v892 = vpop.trf.xlu0
    %v893 = vpop.trf.xlu0
    %v894 = vpop.trf.xlu0
    %vm895 = vcmask 130048
    %v897 = vsel %vm895, %v879, 0
    %v900 = vsel %vm895, %v880, 0
    %v903 = vsel %vm895, %v881, 0
    %v906 = vsel %vm895, %v882, 0
    %908 = vmatpush.msra.mxu0 0.0
    %909 = vmatpush.msra.mxu0 0.0
    %910 = vmatpush.msra.mxu0 0.0
    %911 = vmatpush.msra.mxu0 0.0
    %912 = vmatpush.msra.mxu0 0.0
    %913 = vmatpush.msra.mxu0 0.0
    %914 = vmatpush.msra.mxu0 0.0
    %915 = vmatpush.msra.mxu0 0.0
    %916 = vmatpush.msra.mxu0 0.0
    %917 = vmatpush.msra.mxu0 0.0
    %918 = vmatpush.msra.mxu0 0.0
    %919 = vmatpush.msra.mxu0 0.0
    %920 = vmatpush.msra.mxu0 0.0
    %921 = vmatpush.msra.mxu0 0.0
    %922 = vmatpush.msra.mxu0 %v856
    %923 = vmatpush.msra.mxu0 %v800
    %924 = vmatmul.f32.gmra.mxu0 %v897
    %v925 = vpop.f32.mrf.mxu0
    %v926 = vadd.f32 0.0, %v925
    %927 = vmatmul.f32.gmra.mxu0 %v900
    %v928 = vpop.f32.mrf.mxu0
    %v929 = vadd.f32 0.0, %v928
    %930 = vmatmul.f32.gmra.mxu0 %v903
    %v931 = vpop.f32.mrf.mxu0
    %v932 = vadd.f32 0.0, %v931
    %933 = vmatmul.f32.gmra.mxu0 %v906
    %v934 = vpop.f32.mrf.mxu0
    %v935 = vadd.f32 0.0, %v934
    %936 = vdwg.mxu0
    %937 = vxpose.xlu0.b32.start [1/16] %v64, 128
    %938 = vxpose.xlu0.b32.cont [2/16] %v65, 128
    %939 = vxpose.xlu0.b32.cont [3/16] 0.0, 128
    %940 = vxpose.xlu0.b32.cont [4/16] 0.0, 128
    %941 = vxpose.xlu0.b32.cont [5/16] 0.0, 128
    %942 = vxpose.xlu0.b32.cont [6/16] 0.0, 128
    %943 = vxpose.xlu0.b32.cont [7/16] 0.0, 128
    %944 = vxpose.xlu0.b32.cont [8/16] 0.0, 128
    %945 = vxpose.xlu0.b32.cont [9/16] 0.0, 128
    %946 = vxpose.xlu0.b32.cont [10/16] 0.0, 128
    %947 = vxpose.xlu0.b32.cont [11/16] 0.0, 128
    %948 = vxpose.xlu0.b32.cont [12/16] 0.0, 128
    %949 = vxpose.xlu0.b32.cont [13/16] 0.0, 128
    %950 = vxpose.xlu0.b32.cont [14/16] 0.0, 128
    %951 = vxpose.xlu0.b32.cont [15/16] 0.0, 128
    %952 = vxpose.xlu0.b32.end [16/16] 0.0, 128
    %v953 = vpop.trf.xlu0
    %v954 = vpop.trf.xlu0
    %v955 = vpop.trf.xlu0
    %v956 = vpop.trf.xlu0
    %v957 = vpop.trf.xlu0
    %v958 = vpop.trf.xlu0
    %v959 = vpop.trf.xlu0
    %v960 = vpop.trf.xlu0
    %v961 = vpop.trf.xlu0
    %v962 = vpop.trf.xlu0
    %v963 = vpop.trf.xlu0
    %v964 = vpop.trf.xlu0
    %v965 = vpop.trf.xlu0
    %v966 = vpop.trf.xlu0
    %v967 = vpop.trf.xlu0
    %v968 = vpop.trf.xlu0
    %v970 = vsel %vm895, %v953, 0
    %v973 = vsel %vm895, %v954, 0
    %v976 = vsel %vm895, %v955, 0
    %v979 = vsel %vm895, %v956, 0
    %981 = vmatpush.msra.mxu0 0.0
    %982 = vmatpush.msra.mxu0 0.0
    %983 = vmatpush.msra.mxu0 0.0
    %984 = vmatpush.msra.mxu0 0.0
    %985 = vmatpush.msra.mxu0 0.0
    %986 = vmatpush.msra.mxu0 0.0
    %987 = vmatpush.msra.mxu0 0.0
    %988 = vmatpush.msra.mxu0 0.0
    %989 = vmatpush.msra.mxu0 0.0
    %990 = vmatpush.msra.mxu0 0.0
    %991 = vmatpush.msra.mxu0 0.0
    %992 = vmatpush.msra.mxu0 0.0
    %993 = vmatpush.msra.mxu0 0.0
    %994 = vmatpush.msra.mxu0 0.0
    %995 = vmatpush.msra.mxu0 %v858
    %996 = vmatpush.msra.mxu0 %v802
    %997 = vmatmul.f32.gmra.mxu0 %v970
    %v998 = vpop.f32.mrf.mxu0
    %v999 = vadd.f32 0.0, %v998
    %1000 = vmatmul.f32.gmra.mxu0 %v973
    %v1001 = vpop.f32.mrf.mxu0
    %v1002 = vadd.f32 0.0, %v1001
    %1003 = vmatmul.f32.gmra.mxu0 %v976
    %v1004 = vpop.f32.mrf.mxu0
    %v1005 = vadd.f32 0.0, %v1004
    %1006 = vmatmul.f32.gmra.mxu0 %v979
    %v1007 = vpop.f32.mrf.mxu0
    %v1008 = vadd.f32 0.0, %v1007
    %1009 = vdwg.mxu0
    %1010 = vxpose.xlu0.b32.start [1/16] %v66, 128
    %1011 = vxpose.xlu0.b32.cont [2/16] %v67, 128
    %1012 = vxpose.xlu0.b32.cont [3/16] 0.0, 128
    %1013 = vxpose.xlu0.b32.cont [4/16] 0.0, 128
    %1014 = vxpose.xlu0.b32.cont [5/16] 0.0, 128
    %1015 = vxpose.xlu0.b32.cont [6/16] 0.0, 128
    %1016 = vxpose.xlu0.b32.cont [7/16] 0.0, 128
    %1017 = vxpose.xlu0.b32.cont [8/16] 0.0, 128
    %1018 = vxpose.xlu0.b32.cont [9/16] 0.0, 128
    %1019 = vxpose.xlu0.b32.cont [10/16] 0.0, 128
    %1020 = vxpose.xlu0.b32.cont [11/16] 0.0, 128
    %1021 = vxpose.xlu0.b32.cont [12/16] 0.0, 128
    %1022 = vxpose.xlu0.b32.cont [13/16] 0.0, 128
    %1023 = vxpose.xlu0.b32.cont [14/16] 0.0, 128
    %1024 = vxpose.xlu0.b32.cont [15/16] 0.0, 128
    %1025 = vxpose.xlu0.b32.end [16/16] 0.0, 128
    %v1026 = vpop.trf.xlu0
    %v1027 = vpop.trf.xlu0
    %v1028 = vpop.trf.xlu0
    %v1029 = vpop.trf.xlu0
    %v1030 = vpop.trf.xlu0
    %v1031 = vpop.trf.xlu0
    %v1032 = vpop.trf.xlu0
    %v1033 = vpop.trf.xlu0
    %v1034 = vpop.trf.xlu0
    %v1035 = vpop.trf.xlu0
    %v1036 = vpop.trf.xlu0
    %v1037 = vpop.trf.xlu0
    %v1038 = vpop.trf.xlu0
    %v1039 = vpop.trf.xlu0
    %v1040 = vpop.trf.xlu0
    %v1041 = vpop.trf.xlu0
    %v1043 = vsel %vm895, %v1026, 0
    %v1046 = vsel %vm895, %v1027, 0
    %v1049 = vsel %vm895, %v1028, 0
    %v1052 = vsel %vm895, %v1029, 0
    %1054 = vmatpush.msra.mxu0 0.0
    %1055 = vmatpush.msra.mxu0 0.0
    %1056 = vmatpush.msra.mxu0 0.0
    %1057 = vmatpush.msra.mxu0 0.0
    %1058 = vmatpush.msra.mxu0 0.0
    %1059 = vmatpush.msra.mxu0 0.0
    %1060 = vmatpush.msra.mxu0 0.0
    %1061 = vmatpush.msra.mxu0 0.0
    %1062 = vmatpush.msra.mxu0 0.0
    %1063 = vmatpush.msra.mxu0 0.0
    %1064 = vmatpush.msra.mxu0 0.0
    %1065 = vmatpush.msra.mxu0 0.0
    %1066 = vmatpush.msra.mxu0 0.0
    %1067 = vmatpush.msra.mxu0 0.0
    %1068 = vmatpush.msra.mxu0 %v860
    %1069 = vmatpush.msra.mxu0 %v804
    %1070 = vmatmul.f32.gmra.mxu0 %v1043
    %v1071 = vpop.f32.mrf.mxu0
    %v1072 = vadd.f32 0.0, %v1071
    %1073 = vmatmul.f32.gmra.mxu0 %v1046
    %v1074 = vpop.f32.mrf.mxu0
    %v1075 = vadd.f32 0.0, %v1074
    %1076 = vmatmul.f32.gmra.mxu0 %v1049
    %v1077 = vpop.f32.mrf.mxu0
    %v1078 = vadd.f32 0.0, %v1077
    %1079 = vmatmul.f32.gmra.mxu0 %v1052
    %v1080 = vpop.f32.mrf.mxu0
    %v1081 = vadd.f32 0.0, %v1080
    %1082 = vdwg.mxu0
    %1083 = vxpose.xlu0.b32.start [1/16] %v68, 128
    %1084 = vxpose.xlu0.b32.cont [2/16] %v69, 128
    %1085 = vxpose.xlu0.b32.cont [3/16] 0.0, 128
    %1086 = vxpose.xlu0.b32.cont [4/16] 0.0, 128
    %1087 = vxpose.xlu0.b32.cont [5/16] 0.0, 128
    %1088 = vxpose.xlu0.b32.cont [6/16] 0.0, 128
    %1089 = vxpose.xlu0.b32.cont [7/16] 0.0, 128
    %1090 = vxpose.xlu0.b32.cont [8/16] 0.0, 128
    %1091 = vxpose.xlu0.b32.cont [9/16] 0.0, 128
    %1092 = vxpose.xlu0.b32.cont [10/16] 0.0, 128
    %1093 = vxpose.xlu0.b32.cont [11/16] 0.0, 128
    %1094 = vxpose.xlu0.b32.cont [12/16] 0.0, 128
    %1095 = vxpose.xlu0.b32.cont [13/16] 0.0, 128
    %1096 = vxpose.xlu0.b32.cont [14/16] 0.0, 128
    %1097 = vxpose.xlu0.b32.cont [15/16] 0.0, 128
    %1098 = vxpose.xlu0.b32.end [16/16] 0.0, 128
    %v1099 = vpop.trf.xlu0
    %v1100 = vpop.trf.xlu0
    %v1101 = vpop.trf.xlu0
    %v1102 = vpop.trf.xlu0
    %v1103 = vpop.trf.xlu0
    %v1104 = vpop.trf.xlu0
    %v1105 = vpop.trf.xlu0
    %v1106 = vpop.trf.xlu0
    %v1107 = vpop.trf.xlu0
    %v1108 = vpop.trf.xlu0
    %v1109 = vpop.trf.xlu0
    %v1110 = vpop.trf.xlu0
    %v1111 = vpop.trf.xlu0
    %v1112 = vpop.trf.xlu0
    %v1113 = vpop.trf.xlu0
    %v1114 = vpop.trf.xlu0
    %v1116 = vsel %vm895, %v1099, 0
    %v1119 = vsel %vm895, %v1100, 0
    %v1122 = vsel %vm895, %v1101, 0
    %v1125 = vsel %vm895, %v1102, 0
    %1127 = vmatpush.msra.mxu0 0.0
    %1128 = vmatpush.msra.mxu0 0.0
    %1129 = vmatpush.msra.mxu0 0.0
    %1130 = vmatpush.msra.mxu0 0.0
    %1131 = vmatpush.msra.mxu0 0.0
    %1132 = vmatpush.msra.mxu0 0.0
    %1133 = vmatpush.msra.mxu0 0.0
    %1134 = vmatpush.msra.mxu0 0.0
    %1135 = vmatpush.msra.mxu0 0.0
    %1136 = vmatpush.msra.mxu0 0.0
    %1137 = vmatpush.msra.mxu0 0.0
    %1138 = vmatpush.msra.mxu0 0.0
    %1139 = vmatpush.msra.mxu0 0.0
    %1140 = vmatpush.msra.mxu0 0.0
    %1141 = vmatpush.msra.mxu0 %v862
    %1142 = vmatpush.msra.mxu0 %v806
    %1143 = vmatmul.f32.gmra.mxu0 %v1116
    %v1144 = vpop.f32.mrf.mxu0
    %v1145 = vadd.f32 0.0, %v1144
    %1146 = vmatmul.f32.gmra.mxu0 %v1119
    %v1147 = vpop.f32.mrf.mxu0
    %v1148 = vadd.f32 0.0, %v1147
    %1149 = vmatmul.f32.gmra.mxu0 %v1122
    %v1150 = vpop.f32.mrf.mxu0
    %v1151 = vadd.f32 0.0, %v1150
    %1152 = vmatmul.f32.gmra.mxu0 %v1125
    %v1153 = vpop.f32.mrf.mxu0
    %v1154 = vadd.f32 0.0, %v1153
    %1155 = vdwg.mxu0
    %1156 = vxpose.xlu0.b32.start [1/16] %v926, 128
    %1157 = vxpose.xlu0.b32.cont [2/16] %v929, 128
    %1158 = vxpose.xlu0.b32.cont [3/16] %v932, 128
    %1159 = vxpose.xlu0.b32.cont [4/16] %v935, 128
    %1160 = vxpose.xlu0.b32.cont [5/16] 0.0, 128
    %1161 = vxpose.xlu0.b32.cont [6/16] 0.0, 128
    %1162 = vxpose.xlu0.b32.cont [7/16] 0.0, 128
    %1163 = vxpose.xlu0.b32.cont [8/16] 0.0, 128
    %1164 = vxpose.xlu0.b32.cont [9/16] 0.0, 128
    %1165 = vxpose.xlu0.b32.cont [10/16] 0.0, 128
    %1166 = vxpose.xlu0.b32.cont [11/16] 0.0, 128
    %1167 = vxpose.xlu0.b32.cont [12/16] 0.0, 128
    %1168 = vxpose.xlu0.b32.cont [13/16] 0.0, 128
    %1169 = vxpose.xlu0.b32.cont [14/16] 0.0, 128
    %1170 = vxpose.xlu0.b32.cont [15/16] 0.0, 128
    %1171 = vxpose.xlu0.b32.end [16/16] 0.0, 128
    %v1172 = vpop.trf.xlu0
    %v1173 = vpop.trf.xlu0
    %v1174 = vpop.trf.xlu0
    %v1175 = vpop.trf.xlu0
    %v1176 = vpop.trf.xlu0
    %v1177 = vpop.trf.xlu0
    %v1178 = vpop.trf.xlu0
    %v1179 = vpop.trf.xlu0
    %v1180 = vpop.trf.xlu0
    %v1181 = vpop.trf.xlu0
    %v1182 = vpop.trf.xlu0
    %v1183 = vpop.trf.xlu0
    %v1184 = vpop.trf.xlu0
    %v1185 = vpop.trf.xlu0
    %v1186 = vpop.trf.xlu0
    %v1187 = vpop.trf.xlu0
    %1188 = vxpose.xlu0.b32.start [1/16] %v999, 128
    %1189 = vxpose.xlu0.b32.cont [2/16] %v1002, 128
    %1190 = vxpose.xlu0.b32.cont [3/16] %v1005, 128
    %1191 = vxpose.xlu0.b32.cont [4/16] %v1008, 128
    %1192 = vxpose.xlu0.b32.cont [5/16] 0.0, 128
    %1193 = vxpose.xlu0.b32.cont [6/16] 0.0, 128
    %1194 = vxpose.xlu0.b32.cont [7/16] 0.0, 128
    %1195 = vxpose.xlu0.b32.cont [8/16] 0.0, 128
    %1196 = vxpose.xlu0.b32.cont [9/16] 0.0, 128
    %1197 = vxpose.xlu0.b32.cont [10/16] 0.0, 128
    %1198 = vxpose.xlu0.b32.cont [11/16] 0.0, 128
    %1199 = vxpose.xlu0.b32.cont [12/16] 0.0, 128
    %1200 = vxpose.xlu0.b32.cont [13/16] 0.0, 128
    %1201 = vxpose.xlu0.b32.cont [14/16] 0.0, 128
    %1202 = vxpose.xlu0.b32.cont [15/16] 0.0, 128
    %1203 = vxpose.xlu0.b32.end [16/16] 0.0, 128
    %v1204 = vpop.trf.xlu0
    %v1205 = vpop.trf.xlu0
    %v1206 = vpop.trf.xlu0
    %v1207 = vpop.trf.xlu0
    %v1208 = vpop.trf.xlu0
    %v1209 = vpop.trf.xlu0
    %v1210 = vpop.trf.xlu0
    %v1211 = vpop.trf.xlu0
    %v1212 = vpop.trf.xlu0
    %v1213 = vpop.trf.xlu0
    %v1214 = vpop.trf.xlu0
    %v1215 = vpop.trf.xlu0
    %v1216 = vpop.trf.xlu0
    %v1217 = vpop.trf.xlu0
    %v1218 = vpop.trf.xlu0
    %v1219 = vpop.trf.xlu0
    %1220 = vxpose.xlu0.b32.start [1/16] %v1072, 128
    %1221 = vxpose.xlu0.b32.cont [2/16] %v1075, 128
    %1222 = vxpose.xlu0.b32.cont [3/16] %v1078, 128
    %1223 = vxpose.xlu0.b32.cont [4/16] %v1081, 128
    %1224 = vxpose.xlu0.b32.cont [5/16] 0.0, 128
    %1225 = vxpose.xlu0.b32.cont [6/16] 0.0, 128
    %1226 = vxpose.xlu0.b32.cont [7/16] 0.0, 128
    %1227 = vxpose.xlu0.b32.cont [8/16] 0.0, 128
    %1228 = vxpose.xlu0.b32.cont [9/16] 0.0, 128
    %1229 = vxpose.xlu0.b32.cont [10/16] 0.0, 128
    %1230 = vxpose.xlu0.b32.cont [11/16] 0.0, 128
    %1231 = vxpose.xlu0.b32.cont [12/16] 0.0, 128
    %1232 = vxpose.xlu0.b32.cont [13/16] 0.0, 128
    %1233 = vxpose.xlu0.b32.cont [14/16] 0.0, 128
    %1234 = vxpose.xlu0.b32.cont [15/16] 0.0, 128
    %1235 = vxpose.xlu0.b32.end [16/16] 0.0, 128
    %v1236 = vpop.trf.xlu0
    %v1237 = vpop.trf.xlu0
    %v1238 = vpop.trf.xlu0
    %v1239 = vpop.trf.xlu0
    %v1240 = vpop.trf.xlu0
    %v1241 = vpop.trf.xlu0
    %v1242 = vpop.trf.xlu0
    %v1243 = vpop.trf.xlu0
    %v1244 = vpop.trf.xlu0
    %v1245 = vpop.trf.xlu0
    %v1246 = vpop.trf.xlu0
    %v1247 = vpop.trf.xlu0
    %v1248 = vpop.trf.xlu0
    %v1249 = vpop.trf.xlu0
    %v1250 = vpop.trf.xlu0
    %v1251 = vpop.trf.xlu0
    %1252 = vxpose.xlu0.b32.start [1/16] %v1145, 128
    %1253 = vxpose.xlu0.b32.cont [2/16] %v1148, 128
    %1254 = vxpose.xlu0.b32.cont [3/16] %v1151, 128
    %1255 = vxpose.xlu0.b32.cont [4/16] %v1154, 128
    %1256 = vxpose.xlu0.b32.cont [5/16] 0.0, 128
    %1257 = vxpose.xlu0.b32.cont [6/16] 0.0, 128
    %1258 = vxpose.xlu0.b32.cont [7/16] 0.0, 128
    %1259 = vxpose.xlu0.b32.cont [8/16] 0.0, 128
    %1260 = vxpose.xlu0.b32.cont [9/16] 0.0, 128
    %1261 = vxpose.xlu0.b32.cont [10/16] 0.0, 128
    %1262 = vxpose.xlu0.b32.cont [11/16] 0.0, 128
    %1263 = vxpose.xlu0.b32.cont [12/16] 0.0, 128
    %1264 = vxpose.xlu0.b32.cont [13/16] 0.0, 128
    %1265 = vxpose.xlu0.b32.cont [14/16] 0.0, 128
    %1266 = vxpose.xlu0.b32.cont [15/16] 0.0, 128
    %1267 = vxpose.xlu0.b32.end [16/16] 0.0, 128
    %v1268 = vpop.trf.xlu0
    %v1269 = vpop.trf.xlu0
    %v1270 = vpop.trf.xlu0
    %v1271 = vpop.trf.xlu0
    %v1272 = vpop.trf.xlu0
    %v1273 = vpop.trf.xlu0
    %v1274 = vpop.trf.xlu0
    %v1275 = vpop.trf.xlu0
    %v1276 = vpop.trf.xlu0
    %v1277 = vpop.trf.xlu0
    %v1278 = vpop.trf.xlu0
    %v1279 = vpop.trf.xlu0
    %v1280 = vpop.trf.xlu0
    %v1281 = vpop.trf.xlu0
    %v1282 = vpop.trf.xlu0
    %v1283 = vpop.trf.xlu0
    %v1284 = vrot.slane %v1236, 4
    %v1285 = vsel %vm135, %v1284, %v1172
    %v1287 = vunpack.c.l.s4 1983009808
    %v1288 = vunpack.c.0.s8 %v1287
    %v1289 = vperm.slane %v1285, %v1288
    %v1290 = vrot.slane %v1268, 4
    %v1291 = vsel %vm135, %v1290, %v1204
    %v1293 = vunpack.c.l.s4 1983009808
    %v1294 = vunpack.c.0.s8 %v1293
    %v1295 = vperm.slane %v1291, %v1294
    %v1296 = vrot.slane %v1295, 4
    %v1297 = vsel %vm135, %v1296, %v1289
    %v1299 = vunpack.c.l.s4 1934713408
    %v1300 = vunpack.c.0.s8 %v1299
    %v1301 = vperm.slane %v1297, %v1300
    %v1302 = vrot.slane %v1301, 4
    %v1303 = vsel %vm135, 0.0, %v1302
    %v1304 = vld [vmem:[#allocation7] sm:$0xf]
    %v1305 = vadd.f32 %v1301, %v1304
    %v1306 = vadd.f32 %v1303, %v1304
    %vm1307 = vcmask 257024
    %1308 = vst.msk [vmem:[#allocation8] sm:$0xf] %vm1307, %v1305
    %1309 = vst.msk [vmem:[#allocation8 + $0x4] sm:$0xf] %vm1307, %v1306
    // Predicated region
    $region26: #{tpu_custom_call.1} parent=1 // pred_check
      _
    $region27: #{tpu_custom_call.1} parent=1 // pred_check_branch
      %1311 = sbr.rel (0) target = $region29
    $region28: #{tpu_custom_call.1} parent=1 // pred_region
      %1313 = vsyncadd [#allocation4], 0
      %s1314 = sshll.u32 [#allocation8], 4
      %s1315 = int_to_ptr.vmem [resolvable:$true] %s1314
      %s1316 = sshll.u32 %s3, 4
      %s1317 = int_to_ptr.hbm [resolvable:$true] %s1316
      %1322 = dma.vmem_to_hbm [thread:$0]  %s1315, 128, %s1317, [#allocation4], 64, 64, 4
    $region29: #{tpu_custom_call.1} parent=1 // pred_fallthru
      _
    // Predicated region
    $region30: #{tpu_custom_call.1} parent=1 // pred_check
      _
    $region31: #{tpu_custom_call.1} parent=1 // pred_check_branch
      %1324 = sbr.rel (0) target = $region33
    $region32: #{tpu_custom_call.1} parent=1 // pred_region
      %1326 = dma.done [#allocation4], 128
    $region33: #{tpu_custom_call.1} parent=1 // pred_fallthru
      _
    %1327 = vsyncpa [#allocation3], 1
    %1328 = vsyncpa [#allocation6], 1
    %1329 = vsyncpa [#allocation4], 1

</llo_original>
